<compile_context>
chip_gen: v5e
topology: v5e:2x2
jax: 0.10.0
libtpu: 0.0.40
codegen_flags: <defaults>
</compile_context>

<pallas_src>
import numpy as np
import jax
import jax.numpy as jnp
from jax.experimental import pallas as pl
from jax.experimental.pallas import tpu as pltpu

MEAN = 0.0
STD = 1.0
MIN = -0.9
MAX = 0.9

# TODO(synk): the PyTorch module picks gauss/cos per-instance from the *global*
# numpy RNG; we reproduce it deterministically with seed 0 (-> "gauss").
_FUNC_NAME = np.random.RandomState(0).choice(["gauss", "cos"])

_GAUSS_SCALE = -0.5 / (STD * STD)

# ~3 MiB per block: double-buffered in+out = 4 x 3 MiB = 12 MiB (< 16 MiB v5e
# scoped VMEM default, far under v6e/v7x budgets).
_TARGET_BLOCK_BYTES = 3 * 1024 * 1024
_LANE_CANDIDATES = (1024, 512, 256, 128)
_SMALL_BYTES = 512 * 1024  # below this, plain jnp is strictly faster (fusable)


def _math_f32(x):
    """Activation math on an f32 array."""
    if _FUNC_NAME == "gauss":
        t = x - MEAN if MEAN != 0.0 else x
        y = jnp.exp(t * t * _GAUSS_SCALE)
        if MIN <= 0.0:
            # exp(.) > 0 >= MIN: lower clamp is dead.
            return jnp.minimum(y, MAX)
        return jnp.clip(y, MIN, MAX)
    return jnp.clip(jnp.cos(x), MIN, MAX)


def _act_kernel(x_ref, o_ref):
    x = x_ref[...].astype(jnp.float32)          # f32 math even for bf16 inputs
    o_ref[...] = _math_f32(x).astype(o_ref.dtype)


def _jnp_forward(x):
    return _math_f32(x.astype(jnp.float32)).astype(x.dtype)


def _sublane_multiple(dtype):
    # 8 for 32-bit, 16 for 16-bit, 32 for 8-bit dtypes.
    itemsize = jnp.dtype(dtype).itemsize
    return max(8, 32 // itemsize)


def _round_up(a, m):
    return ((a + m - 1) // m) * m


def _pallas_2d(x2d, *, donate=False):
    """Tiled, pipelined elementwise kernel over a lane-dense (rows, lane) slab."""
    rows, lane = x2d.shape
    dtype = x2d.dtype
    itemsize = jnp.dtype(dtype).itemsize
    sub = _sublane_multiple(dtype)

    # Byte-budgeted block rows.
    tr = max(1, (_TARGET_BLOCK_BYTES // itemsize) // lane)
    if tr >= rows:
        if rows > sub:
            # Guarantee >= 2 grid steps so both v7x TensorCores stream.
            tr = max(sub, _round_up(pl.cdiv(rows, 2), sub))
        else:
            tr = rows                               # full-extent block: always legal
    else:
        tr = max(sub, (tr // sub) * sub)            # sublane-multiple block rows

    grid = (pl.cdiv(rows, tr),)
    n_work = rows * lane

    return pl.pallas_call(
        _act_kernel,
        out_shape=jax.ShapeDtypeStruct((rows, lane), dtype),
        grid_spec=pl.GridSpec(
            grid=grid,
            in_specs=[pl.BlockSpec((tr, lane), lambda i: (i, 0))],
            out_specs=pl.BlockSpec((tr, lane), lambda i: (i, 0)),
        ),
        compiler_params=pltpu.CompilerParams(
            dimension_semantics=("parallel",),
        ),
        cost_estimate=pl.CostEstimate(
            flops=2 * n_work,
            transcendentals=n_work,
            bytes_accessed=2 * n_work * itemsize,
        ),
        input_output_aliases=({0: 0} if donate else {}),
    )(x2d)


def custom_activation(x, *, force_pallas=False, donate=False):
    """Elementwise activation: clamp(gauss(x), -0.9, 0.9)."""
    orig_shape = x.shape
    dtype = x.dtype
    n = x.size
    if n == 0:
        return x
    itemsize = jnp.dtype(dtype).itemsize

    # Tiny-input fast path: launch overhead dominates; let XLA fuse plain jnp.
    if not force_pallas and n * itemsize < _SMALL_BYTES:
        return _jnp_forward(x)

    flat = x.reshape(-1)
    head = (n // 128) * 128
    if head == 0:
        return _jnp_forward(x)

    # Widest lane-dense column width dividing the aligned head (zero-copy reshape).
    lane = 128
    for cand in _LANE_CANDIDATES:
        if head % cand == 0:
            lane = cand
            break
    rows = head // lane

    head_out = _pallas_2d(flat[:head].reshape(rows, lane), donate=donate).reshape(-1)

    if head == n:
        return head_out.reshape(orig_shape)

    # <128-element ragged tail computed with plain jnp (no full-array pad/slice).
    tail_out = _jnp_forward(flat[head:])
    return jnp.concatenate([head_out, tail_out]).reshape(orig_shape)


def _reference(x):
    xf = x.astype(jnp.float32)
    if _FUNC_NAME == "gauss":
        y = jnp.exp(-((xf - MEAN) ** 2) / (2.0 * STD ** 2))
    else:
        y = jnp.cos(xf)
    return jnp.clip(y, MIN, MAX).astype(x.dtype)


if __name__ == "__main__":
    key = jax.random.PRNGKey(0)

    # Primary test: NCHW shape implied by the module's usage; force the Pallas
    # path so the kernel is exercised even though the tensor is tiny.
    x = jax.random.normal(key, (2, 4, 16, 16), dtype=jnp.float32)
    out = jax.block_until_ready(custom_activation(x, force_pallas=True))
    ref = _reference(x)
    assert out.shape == x.shape and out.dtype == x.dtype
    np.testing.assert_allclose(np.asarray(out), np.asarray(ref),
                               rtol=1e-6, atol=1e-6)

    # Default (auto) path: small input -> jnp fast path, same numerics.
    out_auto = jax.block_until_ready(custom_activation(x))
    np.testing.assert_allclose(np.asarray(out_auto), np.asarray(ref),
                               rtol=1e-6, atol=1e-6)

    # Unaligned size: exercises aligned-head kernel (2-step grid) + jnp tail.
    x2 = jax.random.normal(jax.random.PRNGKey(1), (257, 130), dtype=jnp.float32)
    out2 = jax.block_until_ready(custom_activation(x2, force_pallas=True))
    np.testing.assert_allclose(np.asarray(out2), np.asarray(_reference(x2)),
                               rtol=1e-6, atol=1e-6)

    # bf16 input: kernel computes in f32 and casts on store.
    x3 = jax.random.normal(jax.random.PRNGKey(2), (2, 4, 16, 16),
                           dtype=jnp.bfloat16)
    out3 = jax.block_until_ready(custom_activation(x3, force_pallas=True))
    np.testing.assert_allclose(np.asarray(out3, dtype=np.float32),
                               np.asarray(_reference(x3), dtype=np.float32),
                               rtol=0.0, atol=1e-2)

    print("KERNEL_OK")
</pallas_src>

<mosaic_0001>
module attributes {stable_mosaic.version = 11 : i64} {
  func.func @_act_kernel(%arg0: i32, %arg1: memref<2x1024xf32, #tpu.memory_space<vmem>>, %arg2: memref<2x1024xf32, #tpu.memory_space<vmem>>) attributes {dimension_semantics = [#tpu.dimension_semantics<parallel>], iteration_bounds = array<i64: 1>, scalar_prefetch = 0 : i64, scratch_operands = 0 : i64, tpu.core_type = #tpu.core_type<tc>, window_params = [{transform_indices = @transform_0, window_bounds = array<i64: 2, 1024>}, {transform_indices = @transform_1, window_bounds = array<i64: 2, 1024>}]} {
    %c0 = arith.constant 0 : index
    %c0_0 = arith.constant 0 : index
    %0 = vector.load %arg1[%c0, %c0_0] : memref<2x1024xf32, #tpu.memory_space<vmem>>, vector<2x1024xf32>
    %1 = arith.mulf %0, %0 : vector<2x1024xf32>
    %cst = arith.constant -5.000000e-01 : f32
    %2 = vector.broadcast %cst : f32 to vector<2x1024xf32>
    %3 = arith.mulf %1, %2 : vector<2x1024xf32>
    %4 = math.exp %3 : vector<2x1024xf32>
    %cst_1 = arith.constant 0.899999976 : f32
    %5 = vector.broadcast %cst_1 : f32 to vector<2x1024xf32>
    %6 = arith.minimumf %4, %5 : vector<2x1024xf32>
    %c0_2 = arith.constant 0 : index
    %c0_3 = arith.constant 0 : index
    %7 = vector.load %arg2[%c0_2, %c0_3] : memref<2x1024xf32, #tpu.memory_space<vmem>>, vector<2x1024xf32>
    tpu.vector_store %arg2[%c0_2, %c0_3], %6 {strides = array<i32>} : memref<2x1024xf32, #tpu.memory_space<vmem>>, vector<2x1024xf32>,
    return
  }
  func.func @transform_0(%arg0: i32) -> (i32, i32) {
    %c0_i32 = arith.constant 0 : i32
    %c0_i32_0 = arith.constant 0 : i32
    return %arg0, %c0_i32 : i32, i32
  }
  func.func @transform_1(%arg0: i32) -> (i32, i32) {
    %c0_i32 = arith.constant 0 : i32
    %c0_i32_0 = arith.constant 0 : i32
    return %arg0, %c0_i32 : i32, i32
  }
}

</mosaic_0001>

<llo_original>
// kernel: tpu_custom_call.1
$region0: #{tpu_custom_call.1}
  #allocation0 [shape = 'u32[]', space=smem, size = 0x4, offset = 0x4, fixed_abs, tag = 'smem constant byte address 0x4 - core index']
  #allocation1 [shape = 'u32[72,128]{1,0:T(1,128)}', space=vmem, size = 0x9000, scoped, tag = 'internal scratch']
  %s0 = inlined_call_operand.hbm [shape: f32[2,1024], index: 0, kind: input, shape index: {}]
  %s1 = inlined_call_operand.hbm [shape: f32[2,1024], index: 1, kind: output, shape index: {}]
  %s2 = sld [smem:[#allocation0]]
  $region18: #{tpu_custom_call.1} parent=0
    _
  %s4 = ssub.s32 1, %s2
  %s5 = scalar_select 0, %s4, %s2
  $region1: #{tpu_custom_call.1} parent=0
    #allocation2 [shape = 'u8[8192]{0}', space=vmem, size = 0x2000, scoped, tag = 'input window, operand 0, single buffered']
    #allocation3 [shape = 's32[1]{0}', space=sflag, size = 0x4, scoped, tag = 'scoped memory for tpu_custom_call.1']
    #allocation4 [shape = 's32[1]{0}', space=sflag, size = 0x4, scoped, tag = 'scoped memory for tpu_custom_call.1']
    #allocation5 [shape = 'u8[8192]{0}', space=vmem, size = 0x2000, scoped, tag = 'output window, operand 0, single buffered']
    %6 = vsyncpa [#allocation3], 0
    %7 = vsyncpa [#allocation4], 0
    // Predicated region
    $region2: #{tpu_custom_call.1} parent=1 // pred_check
      _
    $region3: #{tpu_custom_call.1} parent=1 // pred_check_branch
      %9 = sbr.rel (0) target = $region5
    $region4: #{tpu_custom_call.1} parent=1 // pred_region
      %11 = vsyncadd [#allocation3], 0
      %s13 = sshll.u32 %s0, 4
      %s14 = int_to_ptr.hbm [resolvable:$true] %s13
      %s15 = sshll.u32 [#allocation2], 4
      %s16 = int_to_ptr.vmem [resolvable:$true] %s15
      %18 = dma.hbm_to_vmem [thread:$0]  %s14, 256, %s16, [#allocation3]
    $region5: #{tpu_custom_call.1} parent=1 // pred_fallthru
      _
    // Predicated region
    $region6: #{tpu_custom_call.1} parent=1 // pred_check
      _
    $region7: #{tpu_custom_call.1} parent=1 // pred_check_branch
      %20 = sbr.rel (0) target = $region9
    $region8: #{tpu_custom_call.1} parent=1 // pred_region
      %22 = dma.done [#allocation3], 256
    $region9: #{tpu_custom_call.1} parent=1 // pred_fallthru
      _
    %v23 = vld [vmem:[#allocation2] sm:$0xff]
    %v24 = vld [vmem:[#allocation2 + $0x8] sm:$0xff]
    %v25 = vmul.f32 %v23, %v23
    %v26 = vmul.f32 %v24, %v24
    %v27 = vmul.f32 %v25, -0.5
    %v28 = vmul.f32 %v26, -0.5
    %v29 = vmul.f32 %v27, 1.442695
    %v30 = vpow.pop %v29
    %v31 = vmul.f32 %v28, 1.442695
    %v32 = vpow.pop %v31
    %v33 = vmin.f32 %v30, 0.9
    %v34 = vmin.f32 %v32, 0.9
    %35 = vst [vmem:[#allocation5] sm:$0xff] %v33
    %36 = vst [vmem:[#allocation5 + $0x8] sm:$0xff] %v34
    // Predicated region
    $region10: #{tpu_custom_call.1} parent=1 // pred_check
      _
    $region11: #{tpu_custom_call.1} parent=1 // pred_check_branch
      %38 = sbr.rel (0) target = $region13
    $region12: #{tpu_custom_call.1} parent=1 // pred_region
      %40 = vsyncadd [#allocation4], 0
      %s42 = sshll.u32 [#allocation5], 4
      %s43 = int_to_ptr.vmem [resolvable:$true] %s42
      %s44 = sshll.u32 %s1, 4
      %s45 = int_to_ptr.hbm [resolvable:$true] %s44
      %47 = dma.vmem_to_hbm [thread:$0]  %s43, 256, %s45, [#allocation4]
    $region13: #{tpu_custom_call.1} parent=1 // pred_fallthru
      _
    // Predicated region
    $region14: #{tpu_custom_call.1} parent=1 // pred_check
      _
    $region15: #{tpu_custom_call.1} parent=1 // pred_check_branch
      %49 = sbr.rel (0) target = $region17
    $region16: #{tpu_custom_call.1} parent=1 // pred_region
      %51 = dma.done [#allocation4], 256
    $region17: #{tpu_custom_call.1} parent=1 // pred_fallthru
      _
    %52 = vsyncpa [#allocation3], 1
    %53 = vsyncpa [#allocation4], 1

</llo_original>
